<compile_context>
chip_gen: v6e
topology: v6e:2x2x1
jax: 0.10.0
libtpu: 0.0.40
codegen_flags: <defaults>
</compile_context>

<pallas_src>
import functools
import math

import jax
import jax.numpy as jnp
from jax.experimental import pallas as pl
from jax.experimental.pallas import tpu as pltpu


_BATCH_CAP = 64                       # max rows per block (multiple of 16: bf16-safe)
_TARGET_BLOCK_BYTES = 1 * 1024 * 1024  # ~1 MiB per-input block (HBM-roofline sweet spot)


def _cdiv(a, b):
    return -(-a // b)


def _soft_dice_kernel(logits_ref, targets_ref, inter_ref, s1_ref, s2_ref, *,
                      n_elems, tile_n, chunks_per_split, mask_tail):
    j = pl.program_id(2)

    # New (split, batch-block) output block: zero the resident accumulators.
    @pl.when(j == 0)
    def _():
        inter_ref[...] = jnp.zeros_like(inter_ref)
        s1_ref[...] = jnp.zeros_like(s1_ref)
        s2_ref[...] = jnp.zeros_like(s2_ref)

    # (block_b, tile_n) chunk; compute in f32 regardless of input dtype.
    x = logits_ref[...].astype(jnp.float32)
    t = targets_ref[...].astype(jnp.float32)
    p = jax.nn.sigmoid(x)                              # torch.sigmoid(logits)

    if mask_tail:
        # Mask columns past the true flattened length N (ragged tail chunks and
        # fully-over-covered chunks from the N-split).  Uses the *logical* chunk
        # index, so data re-read via the clamped index_map contributes nothing.
        s = pl.program_id(0)
        col0 = (s * chunks_per_split + j) * tile_n
        col = col0 + jax.lax.broadcasted_iota(jnp.int32, x.shape, 1)
        valid = col < n_elems
        p = jnp.where(valid, p, 0.0)
        t = jnp.where(valid, t, 0.0)

    inter_ref[...] += jnp.sum(p * t, axis=-1, keepdims=True)[None]   # (m1*m2).sum(1)
    s1_ref[...] += jnp.sum(p, axis=-1, keepdims=True)[None]          # m1.sum(1)
    s2_ref[...] += jnp.sum(t, axis=-1, keepdims=True)[None]          # m2.sum(1)


def soft_dice_loss(logits, targets, smooth=1.0, *, input_dtype=jnp.bfloat16,
                   max_tile_n=None, target_block_bytes=_TARGET_BLOCK_BYTES):
    """logits, targets: (B, ...) arrays (e.g. NCHW). Returns scalar f32 loss.

    input_dtype: dtype the inputs are cast to before the kernel (default bf16,
      halving HBM bytes; pays off when the cast fuses into the producer or the
      activations are already bf16).  Use None to keep the original dtype.
    max_tile_n: optional cap (multiple of 128) on the lane tile; tuning/testing.
    """
    assert logits.shape == targets.shape
    B = logits.shape[0]
    N = math.prod(logits.shape[1:])

    if input_dtype is not None:
        logits = logits.astype(input_dtype)
        targets = targets.astype(input_dtype)   # 0/1 targets are exact in bf16

    logits2 = logits.reshape(B, N)
    targets2 = targets.reshape(B, N)
    itemsize = logits2.dtype.itemsize

    # ---- block sizing (no padding anywhere) ----------------------------------
    # Rows per block: full batch if it fits (a full-extent dim is always a legal
    # block dim), else 64 (multiple of 8/16 -> legal; ragged tail rows are simply
    # never written back because the output array only has B rows).
    block_b = B if B <= _BATCH_CAP else _BATCH_CAP

    lane_budget = max(128, (target_block_bytes // (block_b * itemsize)) // 128 * 128)
    if max_tile_n is not None:
        assert max_tile_n % 128 == 0
        lane_budget = min(lane_budget, max_tile_n)
    # Either the whole row in one chunk (full-extent last dim is always legal) or
    # a multiple-of-128 tile with a masked ragged tail.
    tile_n = N if N <= lane_budget else lane_budget

    batch_blocks = _cdiv(B, block_b)
    n_chunks = _cdiv(N, tile_n)
    # v7x has 2 TensorCores: make sure the parallel axes expose >= 2 blocks by
    # splitting the flattened-N range when the batch axis has only one block.
    num_splits = 2 if (batch_blocks == 1 and n_chunks >= 2) else 1
    chunks_per_split = _cdiv(n_chunks, num_splits)
    mask_tail = num_splits * chunks_per_split * tile_n > N

    grid = (num_splits, batch_blocks, chunks_per_split)

    def data_map(s, i, j):
        # Clamp over-covered chunk indices to the last real chunk; the kernel
        # masks those columns to zero using the unclamped logical index.
        jg = jnp.minimum(s * chunks_per_split + j, n_chunks - 1)
        return (i, jg)

    out_map = lambda s, i, j: (s, i, 0)
    out_spec = pl.BlockSpec((1, block_b, 1), out_map)
    partial_shape = jax.ShapeDtypeStruct((num_splits, B, 1), jnp.float32)

    kernel = functools.partial(
        _soft_dice_kernel,
        n_elems=N,
        tile_n=tile_n,
        chunks_per_split=chunks_per_split,
        mask_tail=mask_tail,
    )

    bytes_accessed = (logits2.size * logits2.dtype.itemsize
                      + targets2.size * targets2.dtype.itemsize
                      + 3 * num_splits * B * 4)
    cost = pl.CostEstimate(
        flops=6 * B * N,
        transcendentals=B * N,
        bytes_accessed=bytes_accessed,
    )

    inter_p, s1_p, s2_p = pl.pallas_call(
        kernel,
        out_shape=(partial_shape, partial_shape, partial_shape),
        grid_spec=pltpu.PrefetchScalarGridSpec(
            num_scalar_prefetch=0,
            grid=grid,
            in_specs=[
                pl.BlockSpec((block_b, tile_n), data_map),
                pl.BlockSpec((block_b, tile_n), data_map),
            ],
            out_specs=(out_spec, out_spec, out_spec),
        ),
        compiler_params=pltpu.CompilerParams(
            # split & batch-block axes parallel (shards across v7x's 2 TCs),
            # spatial reduction axis serial (resident accumulators).
            dimension_semantics=("parallel", "parallel", "arbitrary"),
            vmem_limit_bytes=32 * 1024 * 1024,
        ),
        cost_estimate=cost,
    )(logits2, targets2)

    # Tiny finalize in the wrapper: combine N-split partials, dice, mean, 1 - x.
    inter = jnp.sum(inter_p[:, :, 0], axis=0)
    s1 = jnp.sum(s1_p[:, :, 0], axis=0)
    s2 = jnp.sum(s2_p[:, :, 0], axis=0)
    score = 2.0 * (inter + smooth) / (s1 + s2 + smooth)
    return 1.0 - jnp.sum(score) / B


def soft_dice_loss_ref(logits, targets, smooth=1.0):
    B = logits.shape[0]
    probs = jax.nn.sigmoid(logits.astype(jnp.float32)).reshape(B, -1)
    t = targets.astype(jnp.float32).reshape(B, -1)
    inter = jnp.sum(probs * t, axis=1)
    score = 2.0 * (inter + smooth) / (jnp.sum(probs, 1) + jnp.sum(t, 1) + smooth)
    return 1.0 - jnp.sum(score) / B


if __name__ == "__main__":
    key = jax.random.PRNGKey(0)
    k1, k2, k3, k4 = jax.random.split(key, 4)

    # Test 1: default path (bf16 inputs, the HBM-halving cast from the review).
    B, C, H, W = 2, 4, 16, 16
    logits = jax.random.normal(k1, (B, C, H, W), dtype=jnp.float32)
    targets = (jax.random.uniform(k2, (B, C, H, W)) > 0.5).astype(jnp.float32)

    loss_bf16 = jax.block_until_ready(soft_dice_loss(logits, targets, smooth=1.0))
    ref_bf16 = soft_dice_loss_ref(logits.astype(jnp.bfloat16),
                                  targets.astype(jnp.bfloat16), smooth=1.0)
    assert jnp.allclose(loss_bf16, ref_bf16, rtol=1e-4, atol=1e-5), (loss_bf16, ref_bf16)

    # Test 2: exact-dtype path (input_dtype=None keeps the module's f32 numerics).
    loss_f32 = jax.block_until_ready(
        soft_dice_loss(logits, targets, smooth=1.0, input_dtype=None))
    ref_f32 = soft_dice_loss_ref(logits, targets, smooth=1.0)
    assert jnp.allclose(loss_f32, ref_f32, rtol=1e-5, atol=1e-6), (loss_f32, ref_f32)

    # Test 3: ragged spatial length (N=1110, not a multiple of 128) with a forced
    # small tile -> exercises in-kernel tail masking, index-map clamping, and the
    # two-way N split (v7x dual-TensorCore path).
    B2, C2, H2, W2 = 3, 1, 30, 37
    logits2 = jax.random.normal(k3, (B2, C2, H2, W2), dtype=jnp.float32)
    targets2 = (jax.random.uniform(k4, (B2, C2, H2, W2)) > 0.5).astype(jnp.float32)
    loss_rag = jax.block_until_ready(
        soft_dice_loss(logits2, targets2, smooth=1.0, input_dtype=None, max_tile_n=256))
    ref_rag = soft_dice_loss_ref(logits2, targets2, smooth=1.0)
    assert jnp.allclose(loss_rag, ref_rag, rtol=1e-5, atol=1e-6), (loss_rag, ref_rag)

    print("KERNEL_OK")
</pallas_src>

<mosaic_0001>
module attributes {stable_mosaic.version = 11 : i64} {
  func.func @_soft_dice_kernel(%arg0: i32, %arg1: i32, %arg2: i32, %arg3: memref<2x1024xbf16, #tpu.memory_space<vmem>>, %arg4: memref<2x1024xbf16, #tpu.memory_space<vmem>>, %arg5: memref<1x2x1xf32, #tpu.memory_space<vmem>>, %arg6: memref<1x2x1xf32, #tpu.memory_space<vmem>>, %arg7: memref<1x2x1xf32, #tpu.memory_space<vmem>>) attributes {dimension_semantics = [#tpu.dimension_semantics<parallel>, #tpu.dimension_semantics<parallel>, #tpu.dimension_semantics<arbitrary>], iteration_bounds = array<i64: 1, 1, 1>, scalar_prefetch = 0 : i64, scratch_operands = 0 : i64, tpu.core_type = #tpu.core_type<tc>, window_params = [{transform_indices = @transform_0, window_bounds = array<i64: 2, 1024>}, {transform_indices = @transform_1, window_bounds = array<i64: 2, 1024>}, {transform_indices = @transform_2, window_bounds = array<i64: 1, 2, 1>}, {transform_indices = @transform_3, window_bounds = array<i64: 1, 2, 1>}, {transform_indices = @transform_4, window_bounds = array<i64: 1, 2, 1>}]} {
    %c0_i32 = arith.constant 0 : i32
    %0 = arith.cmpi eq, %arg2, %c0_i32 : i32
    %1 = arith.extui %0 : i1 to i32
    %c0_i32_0 = arith.constant 0 : i32
    %2 = arith.cmpi ne, %1, %c0_i32_0 : i32
    scf.if %2 {
      %cst_25 = arith.constant 0.000000e+00 : f32
      %31 = vector.broadcast %cst_25 : f32 to vector<1x2x1xf32>
      %c0_26 = arith.constant 0 : index
      %c0_27 = arith.constant 0 : index
      %c0_28 = arith.constant 0 : index
      %32 = vector.load %arg5[%c0_26, %c0_27, %c0_28] : memref<1x2x1xf32, #tpu.memory_space<vmem>>, vector<1x2x1xf32>
      tpu.vector_store %arg5[%c0_26, %c0_27, %c0_28], %31 {strides = array<i32>} : memref<1x2x1xf32, #tpu.memory_space<vmem>>, vector<1x2x1xf32>,
      %cst_29 = arith.constant 0.000000e+00 : f32
      %33 = vector.broadcast %cst_29 : f32 to vector<1x2x1xf32>
      %c0_30 = arith.constant 0 : index
      %c0_31 = arith.constant 0 : index
      %c0_32 = arith.constant 0 : index
      %34 = vector.load %arg6[%c0_30, %c0_31, %c0_32] : memref<1x2x1xf32, #tpu.memory_space<vmem>>, vector<1x2x1xf32>
      tpu.vector_store %arg6[%c0_30, %c0_31, %c0_32], %33 {strides = array<i32>} : memref<1x2x1xf32, #tpu.memory_space<vmem>>, vector<1x2x1xf32>,
      %cst_33 = arith.constant 0.000000e+00 : f32
      %35 = vector.broadcast %cst_33 : f32 to vector<1x2x1xf32>
      %c0_34 = arith.constant 0 : index
      %c0_35 = arith.constant 0 : index
      %c0_36 = arith.constant 0 : index
      %36 = vector.load %arg7[%c0_34, %c0_35, %c0_36] : memref<1x2x1xf32, #tpu.memory_space<vmem>>, vector<1x2x1xf32>
      tpu.vector_store %arg7[%c0_34, %c0_35, %c0_36], %35 {strides = array<i32>} : memref<1x2x1xf32, #tpu.memory_space<vmem>>, vector<1x2x1xf32>,
    } else {
    }
    %c0 = arith.constant 0 : index
    %c0_1 = arith.constant 0 : index
    %3 = vector.load %arg3[%c0, %c0_1] : memref<2x1024xbf16, #tpu.memory_space<vmem>>, vector<2x1024xbf16>
    %4 = arith.extf %3 : vector<2x1024xbf16> to vector<2x1024xf32>
    %c0_2 = arith.constant 0 : index
    %c0_3 = arith.constant 0 : index
    %5 = vector.load %arg4[%c0_2, %c0_3] : memref<2x1024xbf16, #tpu.memory_space<vmem>>, vector<2x1024xbf16>
    %6 = arith.extf %5 : vector<2x1024xbf16> to vector<2x1024xf32>
    %7 = arith.negf %4 : vector<2x1024xf32>
    %8 = math.exp %7 : vector<2x1024xf32>
    %cst = arith.constant 1.000000e+00 : f32
    %9 = vector.broadcast %cst : f32 to vector<2x1024xf32>
    %10 = arith.addf %9, %8 : vector<2x1024xf32>
    %11 = arith.divf %9, %10 : vector<2x1024xf32>
    %c0_4 = arith.constant 0 : index
    %c0_5 = arith.constant 0 : index
    %c0_6 = arith.constant 0 : index
    %12 = vector.load %arg5[%c0_4, %c0_5, %c0_6] : memref<1x2x1xf32, #tpu.memory_space<vmem>>, vector<1x2x1xf32>
    %13 = arith.mulf %11, %6 : vector<2x1024xf32>
    %cst_7 = arith.constant dense<0.000000e+00> : vector<2xf32>
    %14 = vector.multi_reduction <add>, %13, %cst_7 [1] : vector<2x1024xf32> to vector<2xf32>
    %15 = vector.shape_cast %14 : vector<2xf32> to vector<2x1xf32>
    %16 = vector.shape_cast %15 : vector<2x1xf32> to vector<1x2x1xf32>
    %17 = arith.addf %12, %16 : vector<1x2x1xf32>
    %c0_8 = arith.constant 0 : index
    %c0_9 = arith.constant 0 : index
    %c0_10 = arith.constant 0 : index
    %18 = vector.load %arg5[%c0_8, %c0_9, %c0_10] : memref<1x2x1xf32, #tpu.memory_space<vmem>>, vector<1x2x1xf32>
    tpu.vector_store %arg5[%c0_8, %c0_9, %c0_10], %17 {strides = array<i32>} : memref<1x2x1xf32, #tpu.memory_space<vmem>>, vector<1x2x1xf32>,
    %c0_11 = arith.constant 0 : index
    %c0_12 = arith.constant 0 : index
    %c0_13 = arith.constant 0 : index
    %19 = vector.load %arg6[%c0_11, %c0_12, %c0_13] : memref<1x2x1xf32, #tpu.memory_space<vmem>>, vector<1x2x1xf32>
    %cst_14 = arith.constant dense<0.000000e+00> : vector<2xf32>
    %20 = vector.multi_reduction <add>, %11, %cst_14 [1] : vector<2x1024xf32> to vector<2xf32>
    %21 = vector.shape_cast %20 : vector<2xf32> to vector<2x1xf32>
    %22 = vector.shape_cast %21 : vector<2x1xf32> to vector<1x2x1xf32>
    %23 = arith.addf %19, %22 : vector<1x2x1xf32>
    %c0_15 = arith.constant 0 : index
    %c0_16 = arith.constant 0 : index
    %c0_17 = arith.constant 0 : index
    %24 = vector.load %arg6[%c0_15, %c0_16, %c0_17] : memref<1x2x1xf32, #tpu.memory_space<vmem>>, vector<1x2x1xf32>
    tpu.vector_store %arg6[%c0_15, %c0_16, %c0_17], %23 {strides = array<i32>} : memref<1x2x1xf32, #tpu.memory_space<vmem>>, vector<1x2x1xf32>,
    %c0_18 = arith.constant 0 : index
    %c0_19 = arith.constant 0 : index
    %c0_20 = arith.constant 0 : index
    %25 = vector.load %arg7[%c0_18, %c0_19, %c0_20] : memref<1x2x1xf32, #tpu.memory_space<vmem>>, vector<1x2x1xf32>
    %cst_21 = arith.constant dense<0.000000e+00> : vector<2xf32>
    %26 = vector.multi_reduction <add>, %6, %cst_21 [1] : vector<2x1024xf32> to vector<2xf32>
    %27 = vector.shape_cast %26 : vector<2xf32> to vector<2x1xf32>
    %28 = vector.shape_cast %27 : vector<2x1xf32> to vector<1x2x1xf32>
    %29 = arith.addf %25, %28 : vector<1x2x1xf32>
    %c0_22 = arith.constant 0 : index
    %c0_23 = arith.constant 0 : index
    %c0_24 = arith.constant 0 : index
    %30 = vector.load %arg7[%c0_22, %c0_23, %c0_24] : memref<1x2x1xf32, #tpu.memory_space<vmem>>, vector<1x2x1xf32>
    tpu.vector_store %arg7[%c0_22, %c0_23, %c0_24], %29 {strides = array<i32>} : memref<1x2x1xf32, #tpu.memory_space<vmem>>, vector<1x2x1xf32>,
    return
  }
  func.func @transform_0(%arg0: i32, %arg1: i32, %arg2: i32) -> (i32, i32) {
    %c1_i32 = arith.constant 1 : i32
    %0 = arith.muli %arg0, %c1_i32 : i32
    %1 = arith.addi %0, %arg2 : i32
    %c0_i32 = arith.constant 0 : i32
    %2 = arith.minsi %1, %c0_i32 : i32
    %c0_i32_0 = arith.constant 0 : i32
    return %arg1, %2 : i32, i32
  }
  func.func @transform_1(%arg0: i32, %arg1: i32, %arg2: i32) -> (i32, i32) {
    %c1_i32 = arith.constant 1 : i32
    %0 = arith.muli %arg0, %c1_i32 : i32
    %1 = arith.addi %0, %arg2 : i32
    %c0_i32 = arith.constant 0 : i32
    %2 = arith.minsi %1, %c0_i32 : i32
    %c0_i32_0 = arith.constant 0 : i32
    return %arg1, %2 : i32, i32
  }
  func.func @transform_2(%arg0: i32, %arg1: i32, %arg2: i32) -> (i32, i32, i32) {
    %c0_i32 = arith.constant 0 : i32
    %c0_i32_0 = arith.constant 0 : i32
    return %arg0, %arg1, %c0_i32 : i32, i32, i32
  }
  func.func @transform_3(%arg0: i32, %arg1: i32, %arg2: i32) -> (i32, i32, i32) {
    %c0_i32 = arith.constant 0 : i32
    %c0_i32_0 = arith.constant 0 : i32
    return %arg0, %arg1, %c0_i32 : i32, i32, i32
  }
  func.func @transform_4(%arg0: i32, %arg1: i32, %arg2: i32) -> (i32, i32, i32) {
    %c0_i32 = arith.constant 0 : i32
    %c0_i32_0 = arith.constant 0 : i32
    return %arg0, %arg1, %c0_i32 : i32, i32, i32
  }
}

</mosaic_0001>

<llo_original>
// kernel: tpu_custom_call.1
$region0: #{tpu_custom_call.1}
  #allocation0 [shape = 'u32[]', space=smem, size = 0x4, offset = 0x4, fixed_abs, tag = 'smem constant byte address 0x4 - core index']
  #allocation1 [shape = 'u32[144,128]{1,0:T(1,128)}', space=vmem, size = 0x12000, scoped, tag = 'internal scratch']
  %s0 = inlined_call_operand.hbm [shape: bf16[2,1024], index: 0, kind: input, shape index: {}]
  %s1 = inlined_call_operand.hbm [shape: bf16[2,1024], index: 1, kind: input, shape index: {}]
  %s2 = inlined_call_operand.vmem [shape: f32[1,2,1], index: 2, kind: output, shape index: {0}]
  %s3 = inlined_call_operand.vmem [shape: f32[1,2,1], index: 3, kind: output, shape index: {1}]
  %s4 = inlined_call_operand.vmem [shape: f32[1,2,1], index: 4, kind: output, shape index: {2}]
  %5 = xla_tuple %s2, %s3, %s4
  %s6 = sld [smem:[#allocation0]]
  $region46: #{tpu_custom_call.1} parent=0
    _
  %s8 = ssub.s32 1, %s6
  %s9 = scalar_select 0, %s8, %s6
  $region1: #{tpu_custom_call.1} parent=0
    #allocation2 [shape = 'u8[4096]{0}', space=vmem, size = 0x1000, scoped, tag = 'input window, operand 0, single buffered']
    #allocation3 [shape = 's32[1]{0}', space=sflag, size = 0x4, scoped, tag = 'scoped memory for tpu_custom_call.1']
    #allocation4 [shape = 'u8[4096]{0}', space=vmem, size = 0x1000, scoped, tag = 'input window, operand 1, single buffered']
    #allocation5 [shape = 's32[1]{0}', space=sflag, size = 0x4, scoped, tag = 'scoped memory for tpu_custom_call.1']
    %10 = vsyncpa [#allocation3], 0
    %11 = vsyncpa [#allocation5], 0
    // Predicated region
    $region2: #{tpu_custom_call.1} parent=1 // pred_check
      _
    $region3: #{tpu_custom_call.1} parent=1 // pred_check_branch
      %13 = sbr.rel (0) target = $region5
    $region4: #{tpu_custom_call.1} parent=1 // pred_region
      %s14 = sadd.s32 0, 0
      %p15 = scmp.lt.s32.totalorder %s14, 0
      %s16 = scalar_select %p15, %s14, 0
      %s17 = smul.u32 8, %s16
      %s19 = ssub.s32 128, 128
      %20 = vsyncadd [#allocation3], %s19
      %s21 = smul.addr %s17, 16
      %s22 = scalar_lea.hbm %s0, %s21
      %s24 = sshll.u32 [#allocation2], 4
      %s25 = int_to_ptr.vmem [resolvable:$true] %s24
      %27 = dma.hbm_to_vmem [thread:$0]  %s22, 128, %s25, [#allocation3]
    $region5: #{tpu_custom_call.1} parent=1 // pred_fallthru
      _
    // Predicated region
    $region6: #{tpu_custom_call.1} parent=1 // pred_check
      _
    $region7: #{tpu_custom_call.1} parent=1 // pred_check_branch
      %29 = sbr.rel (0) target = $region9
    $region8: #{tpu_custom_call.1} parent=1 // pred_region
      %s30 = sadd.s32 0, 0
      %p31 = scmp.lt.s32.totalorder %s30, 0
      %s32 = scalar_select %p31, %s30, 0
      %s33 = smul.u32 8, %s32
      %s35 = ssub.s32 128, 128
      %36 = vsyncadd [#allocation5], %s35
      %s37 = smul.addr %s33, 16
      %s38 = scalar_lea.hbm %s1, %s37
      %s40 = sshll.u32 [#allocation4], 4
      %s41 = int_to_ptr.vmem [resolvable:$true] %s40
      %43 = dma.hbm_to_vmem [thread:$0]  %s38, 128, %s41, [#allocation5]
    $region9: #{tpu_custom_call.1} parent=1 // pred_fallthru
      _
    // Predicated region
    $region10: #{tpu_custom_call.1} parent=1 // pred_check
      _
    $region11: #{tpu_custom_call.1} parent=1 // pred_check_branch
      %45 = sbr.rel (0) target = $region13
    $region12: #{tpu_custom_call.1} parent=1 // pred_region
      %46 = dma.done [#allocation3], 128
    $region13: #{tpu_custom_call.1} parent=1 // pred_fallthru
      _
    // Predicated region
    $region14: #{tpu_custom_call.1} parent=1 // pred_check
      _
    $region15: #{tpu_custom_call.1} parent=1 // pred_check_branch
      %48 = sbr.rel (0) target = $region17
    $region16: #{tpu_custom_call.1} parent=1 // pred_region
      %49 = dma.done [#allocation5], 128
    $region17: #{tpu_custom_call.1} parent=1 // pred_fallthru
      _
    %s50 = sadd.s32 0, 0
    %p51 = scmp.lt.s32.totalorder %s50, 0
    %s52 = scalar_select %p51, %s50, 0
    %s53 = smul.u32 8, %s52
    %s54 = sadd.s32 0, 0
    %p55 = scmp.lt.s32.totalorder %s54, 0
    %s56 = scalar_select %p55, %s54, 0
    %s57 = smul.u32 8, %s56
    %p58 = scmp.eq.s32.totalorder 0, 0
    // Predicated region
    $region18: #{tpu_custom_call.1} parent=1 // pred_check
      %p59 = pneg %p58
    $region19: #{tpu_custom_call.1} parent=1 // pred_check_branch
      %61 = sbr.rel (%p59) target = $region21
    $region20: #{tpu_custom_call.1} parent=1 // pred_region
      %vm62 = vcmask 1024
      %63 = vst.msk [vmem:[%s2] sm:$0x3] %vm62, 0.0
      %64 = vst.msk [vmem:[%s3] sm:$0x3] %vm62, 0.0
      %65 = vst.msk [vmem:[%s4] sm:$0x3] %vm62, 0.0
    $region21: #{tpu_custom_call.1} parent=1 // pred_fallthru
      _
    %v66 = vld [vmem:[#allocation2] sm:$0xff]
    %v67 = vunpack.c.l.bf16 %v66
    %v68 = vunpack.c.h.bf16 %v66
    %v69 = vld [vmem:[#allocation4] sm:$0xff]
    %v70 = vunpack.c.l.bf16 %v69
    %v71 = vunpack.c.h.bf16 %v69
    %v72 = vxor.u32 %v67, 2147483648
    %v73 = vxor.u32 %v68, 2147483648
    %v74 = vmul.f32 %v72, 1.442695
    %v75 = vpow.pop %v74
    %v76 = vmul.f32 %v73, 1.442695
    %v77 = vpow.pop %v76
    %v78 = vadd.f32 %v75, 1.0
    %v79 = vadd.f32 %v77, 1.0
    %v80 = vrcp.pop %v78
    %v81 = vmul.f32 1.0, %v80
    %v82 = vrcp.pop %v79
    %v83 = vmul.f32 1.0, %v82
    %v84 = vld [vmem:[%s2] sm:$0x3]
    %v85 = vmul.f32 %v81, %v70
    %v86 = vmul.f32 %v83, %v71
    %v89 = vcombine.high %v85, %v85
    %v91 = vunpack.c.l.s4 1983009808
    %v92 = vunpack.c.0.s8 %v91
    %v93 = vlaneseq
    %v94 = vshrl.u32 %v93, 7
    %v95 = vsub.s32 %v92, %v94
    %v96 = vrot.slane %v85, %v95
    %v98 = vunpack.c.l.s4 1983009808
    %v99 = vunpack.c.0.s8 %v98
    %v100 = vlaneseq
    %v101 = vshrl.u32 %v100, 7
    %v102 = vsub.s32 %v99, %v101
    %v103 = vrot.slane %v89, %v102
    %v104 = vcombine.high %v96, %v96
    %v105 = vcombine.high %v103, %v103
    %v106 = vcombine.high %v86, %v86
    %v108 = vunpack.c.l.s4 1983009808
    %v109 = vunpack.c.0.s8 %v108
    %v110 = vlaneseq
    %v111 = vshrl.u32 %v110, 7
    %v112 = vsub.s32 %v109, %v111
    %v113 = vrot.slane %v86, %v112
    %v115 = vunpack.c.l.s4 1983009808
    %v116 = vunpack.c.0.s8 %v115
    %v117 = vlaneseq
    %v118 = vshrl.u32 %v117, 7
    %v119 = vsub.s32 %v116, %v118
    %v120 = vrot.slane %v106, %v119
    %v121 = vcombine.high %v113, %v113
    %v122 = vcombine.high %v120, %v120
    %vm131 = vcmask 1041408
    %v132 = vsel %vm131, %v96, 0.0
    %v133 = vsel %vm131, %v104, 0.0
    %v134 = vadd.f32 %v132, %v133
    %v135 = vsel %vm131, %v103, 0.0
    %v136 = vadd.f32 %v134, %v135
    %v137 = vsel %vm131, %v105, 0.0
    %v138 = vadd.f32 %v136, %v137
    %v139 = vsel %vm131, %v113, 0.0
    %v140 = vadd.f32 %v138, %v139
    %v141 = vsel %vm131, %v121, 0.0
    %v142 = vadd.f32 %v140, %v141
    %v143 = vsel %vm131, %v120, 0.0
    %v144 = vadd.f32 %v142, %v143
    %v145 = vsel %vm131, %v122, 0.0
    %v146 = vadd.f32 %v144, %v145
    %147 = vadd.xlane.f32.xlu0 %v146
    %v148 = vpop.xlane.xlu0 %147
    %v149 = vadd.f32 %v84, %v148
    %vm150 = vcmask 1024
    %151 = vst.msk [vmem:[%s2] sm:$0x3] %vm150, %v149
    %v152 = vld [vmem:[%s3] sm:$0x3]
    %v155 = vcombine.high %v81, %v81
    %v157 = vunpack.c.l.s4 1983009808
    %v158 = vunpack.c.0.s8 %v157
    %v159 = vlaneseq
    %v160 = vshrl.u32 %v159, 7
    %v161 = vsub.s32 %v158, %v160
    %v162 = vrot.slane %v81, %v161
    %v164 = vunpack.c.l.s4 1983009808
    %v165 = vunpack.c.0.s8 %v164
    %v166 = vlaneseq
    %v167 = vshrl.u32 %v166, 7
    %v168 = vsub.s32 %v165, %v167
    %v169 = vrot.slane %v155, %v168
    %v170 = vcombine.high %v162, %v162
    %v171 = vcombine.high %v169, %v169
    %v172 = vcombine.high %v83, %v83
    %v174 = vunpack.c.l.s4 1983009808
    %v175 = vunpack.c.0.s8 %v174
    %v176 = vlaneseq
    %v177 = vshrl.u32 %v176, 7
    %v178 = vsub.s32 %v175, %v177
    %v179 = vrot.slane %v83, %v178
    %v181 = vunpack.c.l.s4 1983009808
    %v182 = vunpack.c.0.s8 %v181
    %v183 = vlaneseq
    %v184 = vshrl.u32 %v183, 7
    %v185 = vsub.s32 %v182, %v184
    %v186 = vrot.slane %v172, %v185
    %v187 = vcombine.high %v179, %v179
    %v188 = vcombine.high %v186, %v186
    %v197 = vsel %vm131, %v162, 0.0
    %v198 = vsel %vm131, %v170, 0.0
    %v199 = vadd.f32 %v197, %v198
    %v200 = vsel %vm131, %v169, 0.0
    %v201 = vadd.f32 %v199, %v200
    %v202 = vsel %vm131, %v171, 0.0
    %v203 = vadd.f32 %v201, %v202
    %v204 = vsel %vm131, %v179, 0.0
    %v205 = vadd.f32 %v203, %v204
    %v206 = vsel %vm131, %v187, 0.0
    %v207 = vadd.f32 %v205, %v206
    %v208 = vsel %vm131, %v186, 0.0
    %v209 = vadd.f32 %v207, %v208
    %v210 = vsel %vm131, %v188, 0.0
    %v211 = vadd.f32 %v209, %v210
    %212 = vadd.xlane.f32.xlu0 %v211
    %v213 = vpop.xlane.xlu0 %212
    %v214 = vadd.f32 %v152, %v213
    %215 = vst.msk [vmem:[%s3] sm:$0x3] %vm150, %v214
    %v216 = vld [vmem:[%s4] sm:$0x3]
    %v219 = vcombine.high %v70, %v70
    %v221 = vunpack.c.l.s4 1983009808
    %v222 = vunpack.c.0.s8 %v221
    %v223 = vlaneseq
    %v224 = vshrl.u32 %v223, 7
    %v225 = vsub.s32 %v222, %v224
    %v226 = vrot.slane %v70, %v225
    %v228 = vunpack.c.l.s4 1983009808
    %v229 = vunpack.c.0.s8 %v228
    %v230 = vlaneseq
    %v231 = vshrl.u32 %v230, 7
    %v232 = vsub.s32 %v229, %v231
    %v233 = vrot.slane %v219, %v232
    %v234 = vcombine.high %v226, %v226
    %v235 = vcombine.high %v233, %v233
    %v236 = vcombine.high %v71, %v71
    %v238 = vunpack.c.l.s4 1983009808
    %v239 = vunpack.c.0.s8 %v238
    %v240 = vlaneseq
    %v241 = vshrl.u32 %v240, 7
    %v242 = vsub.s32 %v239, %v241
    %v243 = vrot.slane %v71, %v242
    %v245 = vunpack.c.l.s4 1983009808
    %v246 = vunpack.c.0.s8 %v245
    %v247 = vlaneseq
    %v248 = vshrl.u32 %v247, 7
    %v249 = vsub.s32 %v246, %v248
    %v250 = vrot.slane %v236, %v249
    %v251 = vcombine.high %v243, %v243
    %v252 = vcombine.high %v250, %v250
    %v261 = vsel %vm131, %v226, 0.0
    %v262 = vsel %vm131, %v234, 0.0
    %v263 = vadd.f32 %v261, %v262
    %v264 = vsel %vm131, %v233, 0.0
    %v265 = vadd.f32 %v263, %v264
    %v266 = vsel %vm131, %v235, 0.0
    %v267 = vadd.f32 %v265, %v266
    %v268 = vsel %vm131, %v243, 0.0
    %v269 = vadd.f32 %v267, %v268
    %v270 = vsel %vm131, %v251, 0.0
    %v271 = vadd.f32 %v269, %v270
    %v272 = vsel %vm131, %v250, 0.0
    %v273 = vadd.f32 %v271, %v272
    %v274 = vsel %vm131, %v252, 0.0
    %v275 = vadd.f32 %v273, %v274
    %276 = vadd.xlane.f32.xlu0 %v275
    %v277 = vpop.xlane.xlu0 %276
    %v278 = vadd.f32 %v216, %v277
    %279 = vst.msk [vmem:[%s4] sm:$0x3] %vm150, %v278
    // Predicated region
    $region22: #{tpu_custom_call.1} parent=1 // pred_check
      _
    $region23: #{tpu_custom_call.1} parent=1 // pred_check_branch
      %281 = sbr.rel (0) target = $region25
    $region24: #{tpu_custom_call.1} parent=1 // pred_region
      _
    $region25: #{tpu_custom_call.1} parent=1 // pred_fallthru
      _
    // Predicated region
    $region26: #{tpu_custom_call.1} parent=1 // pred_check
      _
    $region27: #{tpu_custom_call.1} parent=1 // pred_check_branch
      %283 = sbr.rel (0) target = $region29
    $region28: #{tpu_custom_call.1} parent=1 // pred_region
      _
    $region29: #{tpu_custom_call.1} parent=1 // pred_fallthru
      _
    // Predicated region
    $region30: #{tpu_custom_call.1} parent=1 // pred_check
      _
    $region31: #{tpu_custom_call.1} parent=1 // pred_check_branch
      %285 = sbr.rel (0) target = $region33
    $region32: #{tpu_custom_call.1} parent=1 // pred_region
      _
    $region33: #{tpu_custom_call.1} parent=1 // pred_fallthru
      _
    // Predicated region
    $region34: #{tpu_custom_call.1} parent=1 // pred_check
      _
    $region35: #{tpu_custom_call.1} parent=1 // pred_check_branch
      %287 = sbr.rel (0) target = $region37
    $region36: #{tpu_custom_call.1} parent=1 // pred_region
      _
    $region37: #{tpu_custom_call.1} parent=1 // pred_fallthru
      _
    // Predicated region
    $region38: #{tpu_custom_call.1} parent=1 // pred_check
      _
    $region39: #{tpu_custom_call.1} parent=1 // pred_check_branch
      %289 = sbr.rel (0) target = $region41
    $region40: #{tpu_custom_call.1} parent=1 // pred_region
      _
    $region41: #{tpu_custom_call.1} parent=1 // pred_fallthru
      _
    // Predicated region
    $region42: #{tpu_custom_call.1} parent=1 // pred_check
      _
    $region43: #{tpu_custom_call.1} parent=1 // pred_check_branch
      %291 = sbr.rel (0) target = $region45
    $region44: #{tpu_custom_call.1} parent=1 // pred_region
      _
    $region45: #{tpu_custom_call.1} parent=1 // pred_fallthru
      _
    %292 = vsyncpa [#allocation3], 1
    %293 = vsyncpa [#allocation5], 1

</llo_original>
